<compile_context>
chip_gen: v5e
topology: v5e:2x2
jax: 0.10.0
libtpu: 0.0.40
codegen_flags: <defaults>
</compile_context>

<pallas_src>
import functools

import jax
import jax.numpy as jnp
from jax import lax
from jax.experimental import pallas as pl
from jax.experimental.pallas import tpu as pltpu

_LANES = 128
_MIB = 1024 * 1024
_CHUNK_BYTES = 1 * _MIB          # bounds the in-kernel exp / mask temporaries


def _kl_div_none(inp, tar):
    # F.kl_div(input, target, reduction='none') == xlogy(target, target) - target * input
    return jnp.where(tar == 0.0, 0.0, tar * jnp.log(tar)) - tar * inp


def _fold_lane_tiles(x):
    """(rows, k*128) -> (rows, 128): sum the 128-lane groups.

    Lane-tile-aligned static slices (no relayout) plus a log-depth tree of
    VALU adds, so the hot-loop reduction never touches the XLU; the single
    128 -> 1 cross-lane collapse happens once, outside the kernel.
    """
    n = x.shape[-1] // _LANES
    chunks = [x[:, i * _LANES:(i + 1) * _LANES] for i in range(n)]
    while len(chunks) > 1:
        nxt = [chunks[i] + chunks[i + 1] for i in range(0, len(chunks) - 1, 2)]
        if len(chunks) % 2:
            nxt.append(chunks[-1])
        chunks = nxt
    return chunks[0]


def _exp_sum_kernel(seg_ref, out_ref, *, hw, tile, chunk, tiles_per_core,
                    n_tiles, ragged, has_pad):
    """Streams seg (B*C, H*W) and accumulates per-core exp-sums into (1, B*C, 128)."""
    t = pl.program_id(1)
    logical_tile = pl.program_id(0) * tiles_per_core + t
    bc = seg_ref.shape[0]

    @pl.when(t == 0)
    def _init():
        out_ref[...] = jnp.zeros_like(out_ref)

    def _accumulate(masked):
        partial = jnp.zeros((bc, _LANES), jnp.float32)
        for k0 in range(0, tile, chunk):
            w = min(chunk, tile - k0)
            xk = seg_ref[:, k0:k0 + w].astype(jnp.float32)
            ek = jnp.exp(xk)
            if masked:
                # Ragged tail: lanes past hw hold unspecified data.  Mask with
                # a select *after* exp (never a multiply-by-mask), so NaN/Inf
                # in the dead lanes cannot propagate.
                col = lax.broadcasted_iota(jnp.int32, ek.shape, 1)
                ek = jnp.where(logical_tile * tile + (k0 + col) < hw, ek, 0.0)
            if w % _LANES == 0:
                partial = partial + _fold_lane_tiles(ek)
            else:
                # tiny-hw fallback (tile < 128): stash the row-sums in lane 0
                # (the remaining lanes stay zero from the init above).
                s = jnp.sum(ek, axis=-1, keepdims=True)
                lane = lax.broadcasted_iota(jnp.int32, partial.shape, 1)
                partial = partial + jnp.where(lane == 0, s, 0.0)
        out_ref[...] += partial[None, :, :]

    if not ragged and not has_pad:
        _accumulate(False)                       # fast path: no per-step masks
    else:
        n_full = n_tiles - 1 if ragged else n_tiles

        @pl.when(logical_tile < n_full)
        def _interior():
            _accumulate(False)                   # interior tiles: plain exp

        if ragged:
            @pl.when(logical_tile == n_tiles - 1)
            def _tail():
                _accumulate(True)                # masked tail, last tile only
        # logical_tile >= n_tiles (grid padding): contributes nothing.


def _gen_vmem_params():
    """(vmem_limit_bytes, per-input-buffer budget) - generation aware."""
    try:
        cap = pltpu.get_tpu_info().vmem_capacity_bytes
    except Exception:        # no hw / unknown field -> conservative, v7x-safe
        cap = None
    if cap is not None and cap > 96 * _MIB:
        return 48 * _MIB, 16 * _MIB      # v5e / v6e: 128 MiB physical VMEM
    return 32 * _MIB, 8 * _MIB           # v7x: 64 MiB physical (or unknown)


def _pick_tile(hw, bc, itemsize, per_buffer, max_tile=None):
    """Largest lane-aligned spatial tile whose double-buffered pair fits."""
    t = (per_buffer // max(1, bc * itemsize)) // _LANES * _LANES
    if max_tile is not None:
        t = min(t, max(_LANES, (max_tile // _LANES) * _LANES))
    # Floor is a single lane-tile, never more (the old 512-lane floor could
    # exceed the scoped limit / v7x physical VMEM for large B*C).
    t = max(t, _LANES)
    if hw <= t:
        if hw < _LANES or hw % _LANES == 0:
            return hw                             # single full-width block
        return (hw // _LANES) * _LANES            # ragged single-tile tail
    if hw % _LANES == 0:
        # Prefer a tile that divides hw exactly (no ragged tail, no masks at
        # all), as long as it stays within 2x of the budgeted size.
        n_lane_tiles = hw // _LANES
        for k in range(t // _LANES, max(1, t // (2 * _LANES)) - 1, -1):
            if n_lane_tiles % k == 0:
                return k * _LANES
    return t


def task_interaction_loss(cls_predict, seg_predict, target, *, max_tile=None):
    b, c = cls_predict.shape
    assert c == b, (
        "Task_Interaction_Loss's (B,)-vs-(B,C) broadcast implicitly requires "
        f"C == B; got B={b}, C={c}.")
    _, _, h, w = seg_predict.shape
    hw = h * w
    bc = b * c

    # Flatten to (B*C, H*W): free for contiguous NCHW and keeps the sublane
    # dimension dense for any (B, C).  Stream in the caller's dtype (pass bf16
    # to halve HBM bytes); cast to f32 happens in-kernel right before exp.
    seg2 = seg_predict.reshape(bc, hw)
    itemsize = jnp.dtype(seg2.dtype).itemsize

    vmem_limit, per_buffer = _gen_vmem_params()
    tile = _pick_tile(hw, bc, itemsize, per_buffer, max_tile)
    chunk = min(tile, max(_LANES, (_CHUNK_BYTES // max(1, bc * 4)) // _LANES * _LANES))
    n_tiles = pl.cdiv(hw, tile)
    ragged = (hw % tile) != 0

    # Split the spatial stream across (up to) 2 TensorCores: leading "parallel"
    # grid axis; each core accumulates an independent partial slab.  On 1-TC
    # chips this just adds one extra tiny output block.
    num_cores = 2 if n_tiles >= 2 else 1
    tiles_per_core = -(-n_tiles // num_cores)
    has_pad = tiles_per_core * num_cores != n_tiles

    if has_pad:
        def seg_index(core, t):
            # Clamp so padded grid steps fetch an in-bounds block (their
            # contribution is skipped inside the kernel).
            return (0, jnp.minimum(core * tiles_per_core + t, n_tiles - 1))
    else:
        def seg_index(core, t):
            return (0, core * tiles_per_core + t)

    kernel = functools.partial(
        _exp_sum_kernel, hw=hw, tile=tile, chunk=chunk,
        tiles_per_core=tiles_per_core, n_tiles=n_tiles,
        ragged=ragged, has_pad=has_pad)

    vmem_needed = (2 * bc * tile * itemsize        # double-buffered input
                   + 4 * bc * _LANES * 4           # (buffered) output block
                   + 3 * bc * chunk * 4            # chunk-bounded temporaries
                   + 4 * _MIB)
    cost = pl.CostEstimate(
        flops=2 * bc * hw,                         # running-sum adds
        transcendentals=bc * hw,                   # one exp per element
        bytes_accessed=bc * hw * itemsize + num_cores * bc * _LANES * 4)

    partials = pl.pallas_call(
        kernel,
        out_shape=jax.ShapeDtypeStruct((num_cores, bc, _LANES), jnp.float32),
        grid_spec=pltpu.PrefetchScalarGridSpec(
            num_scalar_prefetch=0,
            grid=(num_cores, tiles_per_core),
            in_specs=[pl.BlockSpec((bc, tile), seg_index)],
            out_specs=pl.BlockSpec((1, bc, _LANES), lambda core, t: (core, 0, 0)),
        ),
        compiler_params=pltpu.CompilerParams(
            dimension_semantics=("parallel", "arbitrary"),
            vmem_limit_bytes=max(vmem_limit, vmem_needed),
        ),
        cost_estimate=cost,
    )(seg2)

    # ---- tiny (B, C) epilogue in plain JAX (hoisted out of the kernel) -----
    exp_sum = jnp.sum(partials, axis=(0, 2))                  # (B*C,)
    seg_pred = exp_sum.reshape(b, c) / float(hw)
    seg_pred_ = seg_pred - jnp.mean(seg_pred)
    cls_pred = cls_predict.astype(jnp.float32)
    tgt = target.reshape(b, 1).astype(jnp.float32)

    seg_cls_kl = _kl_div_none(cls_pred, seg_pred).sum(-1)     # (B,)
    cls_seg_kl = _kl_div_none(seg_pred, cls_pred).sum(-1)     # (B,)
    ind1 = (cls_pred > 1.0 - cls_pred) == (tgt > 1.0 - tgt)   # (B, C)
    ind2 = (seg_pred_ > 0.0) == (tgt > 1.0 - tgt)             # (B, C)
    # (B,) KL vectors broadcast against (B, C) indicators exactly as in torch
    # (this is the step that requires C == B).
    return (cls_seg_kl * ind1 + seg_cls_kl * ind2).sum() / 2.0 / b


def _reference(cls_predict, seg_predict, target):
    # Pure-JAX transcription of the PyTorch forward, for verification.
    b, c = cls_predict.shape
    h, w = seg_predict.shape[2], seg_predict.shape[3]
    tgt = target.reshape(b, 1)
    seg_pred = jnp.exp(seg_predict).sum(axis=(2, 3)) / (h * w)
    seg_pred_ = seg_pred - seg_pred.mean()
    seg_cls_kl = _kl_div_none(cls_predict, seg_pred).sum(-1)
    cls_seg_kl = _kl_div_none(seg_pred, cls_predict).sum(-1)
    ind1 = (cls_predict > 1 - cls_predict) == (tgt > 1 - tgt)
    ind2 = (seg_pred_ > 0) == (tgt > 1 - tgt)
    return (cls_seg_kl * ind1 + seg_cls_kl * ind2).sum() / 2.0 / b


if __name__ == "__main__":
    key = jax.random.PRNGKey(0)

    def _run_case(idx, b, c, h, w, dtype, max_tile):
        k1, k2, k3 = jax.random.split(jax.random.fold_in(key, idx), 3)
        cls_predict = jax.nn.softmax(
            jax.random.normal(k1, (b, c), jnp.float32), axis=-1)
        seg_predict = (0.1 * jax.random.normal(k2, (b, c, h, w), jnp.float32)
                       ).astype(dtype)
        target = jax.random.bernoulli(k3, 0.5, (b,)).astype(jnp.float32)

        loss = task_interaction_loss(cls_predict, seg_predict, target,
                                     max_tile=max_tile)
        jax.block_until_ready(loss)
        ref = _reference(cls_predict, seg_predict.astype(jnp.float32), target)
        assert jnp.allclose(loss, ref, rtol=1e-5, atol=1e-5), (idx, loss, ref)

    # 1) ragged spatial axis (192 = 128 + 64): masked-tail path, 2-core split.
    _run_case(0, 8, 8, 16, 12, jnp.float32, None)
    # 2) forced multi-tile grid with an odd tile count (5 tiles on 2 cores):
    #    exercises the clamped / skipped padded grid step.
    _run_case(1, 8, 8, 16, 40, jnp.float32, 128)
    # 3) tiny spatial extent (< one lane-tile): lane-0 fallback path.
    _run_case(2, 4, 4, 3, 3, jnp.float32, None)
    # 4) bf16 streaming (half the HBM bytes); exp / accumulation still in f32.
    _run_case(3, 8, 8, 16, 12, jnp.bfloat16, None)

    print("KERNEL_OK")
</pallas_src>

<mosaic_0001>
module attributes {stable_mosaic.version = 11 : i64} {
  func.func @_exp_sum_kernel(%arg0: i32, %arg1: i32, %arg2: memref<64x128xf32, #tpu.memory_space<vmem>>, %arg3: memref<1x64x128xf32, #tpu.memory_space<vmem>>) attributes {dimension_semantics = [#tpu.dimension_semantics<parallel>, #tpu.dimension_semantics<arbitrary>], iteration_bounds = array<i64: 2, 1>, scalar_prefetch = 0 : i64, scratch_operands = 0 : i64, tpu.core_type = #tpu.core_type<tc>, window_params = [{transform_indices = @transform_0, window_bounds = array<i64: 64, 128>}, {transform_indices = @transform_1, window_bounds = array<i64: 1, 64, 128>}]} {
    %c1_i32 = arith.constant 1 : i32
    %0 = arith.muli %arg0, %c1_i32 : i32
    %1 = arith.addi %0, %arg1 : i32
    %c0_i32 = arith.constant 0 : i32
    %2 = arith.cmpi eq, %arg1, %c0_i32 : i32
    %3 = arith.extui %2 : i1 to i32
    %c0_i32_0 = arith.constant 0 : i32
    %4 = arith.cmpi ne, %3, %c0_i32_0 : i32
    scf.if %4 {
      %cst = arith.constant 0.000000e+00 : f32
      %11 = vector.broadcast %cst : f32 to vector<1x64x128xf32>
      %c0 = arith.constant 0 : index
      %c0_5 = arith.constant 0 : index
      %c0_6 = arith.constant 0 : index
      %12 = vector.load %arg3[%c0, %c0_5, %c0_6] : memref<1x64x128xf32, #tpu.memory_space<vmem>>, vector<1x64x128xf32>
      tpu.vector_store %arg3[%c0, %c0_5, %c0_6], %11 {strides = array<i32>} : memref<1x64x128xf32, #tpu.memory_space<vmem>>, vector<1x64x128xf32>,
    } else {
    }
    %c1_i32_1 = arith.constant 1 : i32
    %5 = arith.cmpi slt, %1, %c1_i32_1 : i32
    %6 = arith.extui %5 : i1 to i32
    %c0_i32_2 = arith.constant 0 : i32
    %7 = arith.cmpi ne, %6, %c0_i32_2 : i32
    scf.if %7 {
      %cst = arith.constant 0.000000e+00 : f32
      %11 = vector.broadcast %cst : f32 to vector<64x128xf32>
      %c0 = arith.constant 0 : index
      %c0_5 = arith.constant 0 : index
      %12 = vector.load %arg2[%c0, %c0_5] : memref<64x128xf32, #tpu.memory_space<vmem>>, vector<64x128xf32>
      %13 = math.exp %12 : vector<64x128xf32>
      %14 = arith.addf %11, %13 : vector<64x128xf32>
      %c0_6 = arith.constant 0 : index
      %c0_7 = arith.constant 0 : index
      %c0_8 = arith.constant 0 : index
      %15 = vector.load %arg3[%c0_6, %c0_7, %c0_8] : memref<1x64x128xf32, #tpu.memory_space<vmem>>, vector<1x64x128xf32>
      %16 = vector.shape_cast %14 : vector<64x128xf32> to vector<1x64x128xf32>
      %17 = arith.addf %15, %16 : vector<1x64x128xf32>
      %c0_9 = arith.constant 0 : index
      %c0_10 = arith.constant 0 : index
      %c0_11 = arith.constant 0 : index
      %18 = vector.load %arg3[%c0_9, %c0_10, %c0_11] : memref<1x64x128xf32, #tpu.memory_space<vmem>>, vector<1x64x128xf32>
      tpu.vector_store %arg3[%c0_9, %c0_10, %c0_11], %17 {strides = array<i32>} : memref<1x64x128xf32, #tpu.memory_space<vmem>>, vector<1x64x128xf32>,
    } else {
    }
    %c1_i32_3 = arith.constant 1 : i32
    %8 = arith.cmpi eq, %1, %c1_i32_3 : i32
    %9 = arith.extui %8 : i1 to i32
    %c0_i32_4 = arith.constant 0 : i32
    %10 = arith.cmpi ne, %9, %c0_i32_4 : i32
    scf.if %10 {
      %cst = arith.constant 0.000000e+00 : f32
      %11 = vector.broadcast %cst : f32 to vector<64x128xf32>
      %c0 = arith.constant 0 : index
      %c0_5 = arith.constant 0 : index
      %12 = vector.load %arg2[%c0, %c0_5] : memref<64x128xf32, #tpu.memory_space<vmem>>, vector<64x128xf32>
      %13 = math.exp %12 : vector<64x128xf32>
      %14 = tpu.iota {dimensions = array<i32: 1>} : vector<64x128xi32>
      %c128_i32 = arith.constant 128 : i32
      %15 = arith.muli %1, %c128_i32 : i32
      %c0_i32_6 = arith.constant 0 : i32
      %16 = vector.broadcast %c0_i32_6 : i32 to vector<64x128xi32>
      %17 = arith.addi %16, %14 : vector<64x128xi32>
      %18 = vector.broadcast %15 : i32 to vector<64x128xi32>
      %19 = arith.addi %18, %17 : vector<64x128xi32>
      %c192_i32 = arith.constant 192 : i32
      %20 = vector.broadcast %c192_i32 : i32 to vector<64x128xi32>
      %21 = arith.cmpi slt, %19, %20 : vector<64x128xi32>
      %cst_7 = arith.constant 0.000000e+00 : f32
      %22 = vector.broadcast %cst_7 : f32 to vector<64x128xf32>
      %23 = arith.select %21, %13, %22 : vector<64x128xi1>, vector<64x128xf32>
      %24 = arith.addf %11, %23 : vector<64x128xf32>
      %c0_8 = arith.constant 0 : index
      %c0_9 = arith.constant 0 : index
      %c0_10 = arith.constant 0 : index
      %25 = vector.load %arg3[%c0_8, %c0_9, %c0_10] : memref<1x64x128xf32, #tpu.memory_space<vmem>>, vector<1x64x128xf32>
      %26 = vector.shape_cast %24 : vector<64x128xf32> to vector<1x64x128xf32>
      %27 = arith.addf %25, %26 : vector<1x64x128xf32>
      %c0_11 = arith.constant 0 : index
      %c0_12 = arith.constant 0 : index
      %c0_13 = arith.constant 0 : index
      %28 = vector.load %arg3[%c0_11, %c0_12, %c0_13] : memref<1x64x128xf32, #tpu.memory_space<vmem>>, vector<1x64x128xf32>
      tpu.vector_store %arg3[%c0_11, %c0_12, %c0_13], %27 {strides = array<i32>} : memref<1x64x128xf32, #tpu.memory_space<vmem>>, vector<1x64x128xf32>,
    } else {
    }
    return
  }
  func.func @transform_0(%arg0: i32, %arg1: i32) -> (i32, i32) {
    %c1_i32 = arith.constant 1 : i32
    %0 = arith.muli %arg0, %c1_i32 : i32
    %1 = arith.addi %0, %arg1 : i32
    %c0_i32 = arith.constant 0 : i32
    %c0_i32_0 = arith.constant 0 : i32
    return %c0_i32, %1 : i32, i32
  }
  func.func @transform_1(%arg0: i32, %arg1: i32) -> (i32, i32, i32) {
    %c0_i32 = arith.constant 0 : i32
    %c0_i32_0 = arith.constant 0 : i32
    %c0_i32_1 = arith.constant 0 : i32
    return %arg0, %c0_i32, %c0_i32_0 : i32, i32, i32
  }
}

</mosaic_0001>

<llo_original>
// kernel: tpu_custom_call.1
$region0: #{tpu_custom_call.1}
  #allocation0 [shape = 'u32[]', space=smem, size = 0x4, offset = 0x4, fixed_abs, tag = 'smem constant byte address 0x4 - core index']
  #allocation1 [shape = 'u32[72,128]{1,0:T(1,128)}', space=vmem, size = 0x9000, scoped, tag = 'internal scratch']
  %s0 = inlined_call_operand.hbm [shape: f32[64,192], index: 0, kind: input, shape index: {}]
  %s1 = inlined_call_operand.hbm [shape: f32[2,64,128], index: 1, kind: output, shape index: {}]
  %s2 = sld [smem:[#allocation0]]
  $region53: #{tpu_custom_call.1} parent=0
    _
  %s4 = ssub.s32 1, %s2
  %s5 = scalar_select 0, %s4, %s2
  $region1: #{tpu_custom_call.1} parent=0
    #allocation2 [shape = 'u8[65536]{0}', space=vmem, size = 0x10000, scoped, tag = 'input window, operand 0']
    #allocation3 [shape = 's32[2]{0}', space=sflag, size = 0x8, scoped, tag = 'scoped memory for tpu_custom_call.1']
    #allocation4 [shape = 's32[2]{0}', space=sflag, size = 0x8, scoped, tag = 'scoped memory for tpu_custom_call.1']
    #allocation5 [shape = 'u8[65536]{0}', space=vmem, size = 0x10000, scoped, tag = 'output window, operand 0']
    %6 = vsyncpa [#allocation3], 0
    %s7 = scalar_lea.sflag [#allocation3], 1
    %8 = vsyncpa %s7, 0
    %9 = vsyncpa [#allocation4], 0
    %s10 = scalar_lea.sflag [#allocation4], 1
    %11 = vsyncpa %s10, 0
    loop: start=0, step=1, limit=4
    $region2: #{tpu_custom_call.1} parent=1 // loop_pre_header
      _
    $region3: #{tpu_custom_call.1} parent=1 // loop_header
      %s13 = sphi 0, %s17
      %p14 = scmp.ge.s32.totalorder %s13, 4
      %s20 = sphi 0, %s32
      %s21 = sphi 0, %s28
      %s22 = sphi 0, %s20
      %s23 = sphi 0, %s21
      %s24 = sphi 0, %s22
      %s25 = sphi 0, %s23
      %s37 = sphi 0, %s39
      %s40 = sphi 0, %s37
      %s41 = sphi 0, %s40
      %s57 = sphi 0, %s41
      %s63 = sphi 0, %s65
      %s66 = sphi 0, %s63
      %s67 = sphi 0, %s66
      %s83 = sphi 0, %s67
    $region4: #{tpu_custom_call.1} parent=1 // loop_header_branch
      %16 = sbr.rel (%p14) target = $region8
    $region5: #{tpu_custom_call.1} parent=1 // loop_body
      %s18 = ssub.s32 %s13, 1
      %s19 = ssub.s32 %s13, 2
      %s26 = sadd.s32 1, %s21
      %p27 = scmp.ge.s32.totalorder %s26, 1
      %s28 = scalar_select %p27, 0, %s26
      %s29 = sadd.s32 1, %s20
      %s30 = scalar_select %p27, %s29, %s20
      %p31 = scmp.ge.s32.totalorder %s30, 2
      %s32 = scalar_select %p31, 0, %s30
      %s33 = sadd.s32 %s20, %s21
      %s34 = sadd.s32 %s32, %s28
      %s35 = ssub.s32 %s33, %s34
      %p36 = scmp.eq.s32.totalorder %s35, 0
      %s38 = sadd.s32 %s37, 1
      %s39 = scalar_select %p36, %s37, %s38
      %p42 = pneg %p36
      %p43 = scmp.eq.s32.totalorder %s13, 1
      %p44 = por %p42, %p43
      %p45 = scmp.ne.s32.totalorder %s37, %s40
      %p46 = scmp.eq.s32.totalorder %s13, 0
      %p47 = por %p45, %p46
      %p48 = scmp.ne.s32.totalorder %s37, %s40
      %p49 = scmp.eq.s32.totalorder %s18, 1
      %p50 = por %p48, %p49
      %p51 = scmp.ne.s32.totalorder %s40, %s41
      %p52 = scmp.eq.s32.totalorder %s18, 0
      %p53 = por %p51, %p52
      %p54 = scmp.ne.s32.totalorder %s40, %s41
      %p55 = scmp.eq.s32.totalorder %s19, 1
      %p56 = por %p54, %p55
      %p58 = scmp.ne.s32.totalorder %s41, %s57
      %p59 = scmp.eq.s32.totalorder %s19, 0
      %p60 = por %p58, %p59
      %s61 = ssub.s32 %s20, %s32
      %p62 = scmp.eq.s32.totalorder %s61, 0
      %s64 = sadd.s32 %s63, 1
      %s65 = scalar_select %p62, %s63, %s64
      %p68 = pneg %p62
      %p69 = scmp.eq.s32.totalorder %s13, 1
      %p70 = por %p68, %p69
      %p71 = scmp.ne.s32.totalorder %s63, %s66
      %p72 = scmp.eq.s32.totalorder %s13, 0
      %p73 = por %p71, %p72
      %p74 = scmp.ne.s32.totalorder %s63, %s66
      %p75 = scmp.eq.s32.totalorder %s18, 1
      %p76 = por %p74, %p75
      %p77 = scmp.ne.s32.totalorder %s66, %s67
      %p78 = scmp.eq.s32.totalorder %s18, 0
      %p79 = por %p77, %p78
      %p80 = scmp.ne.s32.totalorder %s66, %s67
      %p81 = scmp.eq.s32.totalorder %s19, 1
      %p82 = por %p80, %p81
      %p84 = scmp.ne.s32.totalorder %s67, %s83
      %p85 = scmp.eq.s32.totalorder %s19, 0
      %p86 = por %p84, %p85
      %p87 = scmp.le.s32.totalorder 1, %s13
      %p88 = scmp.lt.s32.totalorder %s13, 3
      %p89 = pnand %p87, %p88
      %p90 = pneg %p89
      // Predicated region
      $region9: #{tpu_custom_call.1} parent=5 // pred_check
        _
      $region10: #{tpu_custom_call.1} parent=5 // pred_check_branch
        %92 = sbr.rel (%p89) target = $region12
      $region11: #{tpu_custom_call.1} parent=5 // pred_region
        %s93 = ssub.s32 %s13, 1
      $region12: #{tpu_custom_call.1} parent=5 // pred_fallthru
        _
      %p94 = scmp.lt.s32.totalorder %s13, 2
      // Predicated region
      $region13: #{tpu_custom_call.1} parent=5 // pred_check
        %p95 = pneg %p94
      $region14: #{tpu_custom_call.1} parent=5 // pred_check_branch
        %97 = sbr.rel (%p95) target = $region16
      $region15: #{tpu_custom_call.1} parent=5 // pred_region
        // Predicated region
        $region17: #{tpu_custom_call.1} parent=15 // pred_check
          %p98 = pneg %p47
        $region18: #{tpu_custom_call.1} parent=15 // pred_check_branch
          %100 = sbr.rel (%p98) target = $region20
        $region19: #{tpu_custom_call.1} parent=15 // pred_region
          %s101 = sand.u32 %s37, 1
          %s102 = scalar_lea.sflag [#allocation3], %s101
          %s103 = sand.u32 %s37, 1
          %s104 = smul.addr %s103, 64
          %s105 = scalar_lea.vmem [#allocation2], %s104
          %s106 = sadd.s32 %s20, %s21
          %108 = vsyncadd %s102, 0
          %s109 = smul.addr %s106, 8
          %s110 = scalar_lea.hbm %s0, %s109
          %s111 = sshll.u32 %s110, 4
          %s112 = int_to_ptr.hbm [resolvable:$true] %s111
          %s113 = sshll.u32 %s105, 4
          %s114 = int_to_ptr.vmem [resolvable:$true] %s113
          %119 = dma.hbm_to_vmem [thread:$0]  %s112, 1024, %s114, %s102, 256, 128, 8
        $region20: #{tpu_custom_call.1} parent=15 // pred_fallthru
          _
      $region16: #{tpu_custom_call.1} parent=5 // pred_fallthru
        _
      %p120 = scmp.le.s32.totalorder 1, %s13
      %p121 = scmp.lt.s32.totalorder %s13, 3
      %p122 = pnand %p120, %p121
      %p123 = pneg %p122
      // Predicated region
      $region21: #{tpu_custom_call.1} parent=5 // pred_check
        _
      $region22: #{tpu_custom_call.1} parent=5 // pred_check_branch
        %125 = sbr.rel (%p122) target = $region24
      $region23: #{tpu_custom_call.1} parent=5 // pred_region
        %s126 = ssub.s32 %s13, 1
        %s127 = sand.u32 %s40, 1
        %s128 = scalar_lea.sflag [#allocation3], %s127
        %s129 = sand.u32 %s40, 1
        %s130 = smul.addr %s129, 64
        %s131 = scalar_lea.vmem [#allocation2], %s130
        // Predicated region
        $region25: #{tpu_custom_call.1} parent=23 // pred_check
          %p132 = pneg %p53
        $region26: #{tpu_custom_call.1} parent=23 // pred_check_branch
          %134 = sbr.rel (%p132) target = $region28
        $region27: #{tpu_custom_call.1} parent=23 // pred_region
          %136 = dma.done %s128, 1024
        $region28: #{tpu_custom_call.1} parent=23 // pred_fallthru
          _
        %s137 = sand.u32 %s40, 1
        %s138 = scalar_lea.sflag [#allocation3], %s137
        %s139 = sand.u32 %s40, 1
        %s140 = smul.addr %s139, 64
        %s141 = scalar_lea.vmem [#allocation2], %s140
        %p142 = pneg %p53
        %p143 = pneg %p50
        %p144 = pneg %p79
        %p145 = pneg %p76
        %s146 = sand.u32 %s66, 1
        %s147 = scalar_lea.sflag [#allocation4], %s146
        %s148 = sand.u32 %s66, 1
        %s149 = smul.addr %s148, 64
        %s150 = scalar_lea.vmem [#allocation5], %s149
        %s151 = sadd.s32 %s22, %s23
        %s152 = sadd.s32 %s22, %s23
        %p153 = scmp.eq.s32.totalorder %s23, 0
        // Predicated region
        $region29: #{tpu_custom_call.1} parent=23 // pred_check
          %p154 = pneg %p153
        $region30: #{tpu_custom_call.1} parent=23 // pred_check_branch
          %156 = sbr.rel (%p154) target = $region32
        $region31: #{tpu_custom_call.1} parent=23 // pred_region
          %157 = vst [vmem:[%s150] sm:$0xff] 0.0
          %158 = vst [vmem:[%s150 + $0x8] sm:$0xff] 0.0
          %159 = vst [vmem:[%s150 + $0x10] sm:$0xff] 0.0
          %160 = vst [vmem:[%s150 + $0x18] sm:$0xff] 0.0
          %161 = vst [vmem:[%s150 + $0x20] sm:$0xff] 0.0
          %162 = vst [vmem:[%s150 + $0x28] sm:$0xff] 0.0
          %163 = vst [vmem:[%s150 + $0x30] sm:$0xff] 0.0
          %164 = vst [vmem:[%s150 + $0x38] sm:$0xff] 0.0
        $region32: #{tpu_custom_call.1} parent=23 // pred_fallthru
          _
        %p165 = scmp.lt.s32.totalorder %s152, 1
        // Predicated region
        $region33: #{tpu_custom_call.1} parent=23 // pred_check
          %p166 = pneg %p165
        $region34: #{tpu_custom_call.1} parent=23 // pred_check_branch
          %168 = sbr.rel (%p166) target = $region36
        $region35: #{tpu_custom_call.1} parent=23 // pred_region
          %v169 = vld [vmem:[%s131] sm:$0xff]
          %v170 = vld [vmem:[%s131 + $0x8] sm:$0xff]
          %v171 = vld [vmem:[%s131 + $0x10] sm:$0xff]
          %v172 = vld [vmem:[%s131 + $0x18] sm:$0xff]
          %v173 = vld [vmem:[%s131 + $0x20] sm:$0xff]
          %v174 = vld [vmem:[%s131 + $0x28] sm:$0xff]
          %v175 = vld [vmem:[%s131 + $0x30] sm:$0xff]
          %v176 = vld [vmem:[%s131 + $0x38] sm:$0xff]
          %v177 = vmul.f32 %v169, 1.442695
          %v178 = vpow.pop %v177
          %v179 = vmul.f32 %v170, 1.442695
          %v180 = vpow.pop %v179
          %v181 = vmul.f32 %v171, 1.442695
          %v182 = vpow.pop %v181
          %v183 = vmul.f32 %v172, 1.442695
          %v184 = vpow.pop %v183
          %v185 = vmul.f32 %v173, 1.442695
          %v186 = vpow.pop %v185
          %v187 = vmul.f32 %v174, 1.442695
          %v188 = vpow.pop %v187
          %v189 = vmul.f32 %v175, 1.442695
          %v190 = vpow.pop %v189
          %v191 = vmul.f32 %v176, 1.442695
          %v192 = vpow.pop %v191
          %v193 = vadd.f32 %v178, 0.0
          %v194 = vadd.f32 %v180, 0.0
          %v195 = vadd.f32 %v182, 0.0
          %v196 = vadd.f32 %v184, 0.0
          %v197 = vadd.f32 %v186, 0.0
          %v198 = vadd.f32 %v188, 0.0
          %v199 = vadd.f32 %v190, 0.0
          %v200 = vadd.f32 %v192, 0.0
          %v201 = vld [vmem:[%s150] sm:$0xff]
          %v202 = vld [vmem:[%s150 + $0x8] sm:$0xff]
          %v203 = vld [vmem:[%s150 + $0x10] sm:$0xff]
          %v204 = vld [vmem:[%s150 + $0x18] sm:$0xff]
          %v205 = vld [vmem:[%s150 + $0x20] sm:$0xff]
          %v206 = vld [vmem:[%s150 + $0x28] sm:$0xff]
          %v207 = vld [vmem:[%s150 + $0x30] sm:$0xff]
          %v208 = vld [vmem:[%s150 + $0x38] sm:$0xff]
          %v209 = vadd.f32 %v201, %v193
          %v210 = vadd.f32 %v202, %v194
          %v211 = vadd.f32 %v203, %v195
          %v212 = vadd.f32 %v204, %v196
          %v213 = vadd.f32 %v205, %v197
          %v214 = vadd.f32 %v206, %v198
          %v215 = vadd.f32 %v207, %v199
          %v216 = vadd.f32 %v208, %v200
          %217 = vst [vmem:[%s150] sm:$0xff] %v209
          %218 = vst [vmem:[%s150 + $0x8] sm:$0xff] %v210
          %219 = vst [vmem:[%s150 + $0x10] sm:$0xff] %v211
          %220 = vst [vmem:[%s150 + $0x18] sm:$0xff] %v212
          %221 = vst [vmem:[%s150 + $0x20] sm:$0xff] %v213
          %222 = vst [vmem:[%s150 + $0x28] sm:$0xff] %v214
          %223 = vst [vmem:[%s150 + $0x30] sm:$0xff] %v215
          %224 = vst [vmem:[%s150 + $0x38] sm:$0xff] %v216
        $region36: #{tpu_custom_call.1} parent=23 // pred_fallthru
          _
        %p225 = scmp.eq.s32.totalorder %s152, 1
        // Predicated region
        $region37: #{tpu_custom_call.1} parent=23 // pred_check
          %p226 = pneg %p225
        $region38: #{tpu_custom_call.1} parent=23 // pred_check_branch
          %228 = sbr.rel (%p226) target = $region40
        $region39: #{tpu_custom_call.1} parent=23 // pred_region
          %v229 = vld [vmem:[%s131] sm:$0xff]
          %v230 = vld [vmem:[%s131 + $0x8] sm:$0xff]
          %v231 = vld [vmem:[%s131 + $0x10] sm:$0xff]
          %v232 = vld [vmem:[%s131 + $0x18] sm:$0xff]
          %v233 = vld [vmem:[%s131 + $0x20] sm:$0xff]
          %v234 = vld [vmem:[%s131 + $0x28] sm:$0xff]
          %v235 = vld [vmem:[%s131 + $0x30] sm:$0xff]
          %v236 = vld [vmem:[%s131 + $0x38] sm:$0xff]
          %v237 = vmul.f32 %v229, 1.442695
          %v238 = vpow.pop %v237
          %v239 = vmul.f32 %v230, 1.442695
          %v240 = vpow.pop %v239
          %v241 = vmul.f32 %v231, 1.442695
          %v242 = vpow.pop %v241
          %v243 = vmul.f32 %v232, 1.442695
          %v244 = vpow.pop %v243
          %v245 = vmul.f32 %v233, 1.442695
          %v246 = vpow.pop %v245
          %v247 = vmul.f32 %v234, 1.442695
          %v248 = vpow.pop %v247
          %v249 = vmul.f32 %v235, 1.442695
          %v250 = vpow.pop %v249
          %v251 = vmul.f32 %v236, 1.442695
          %v252 = vpow.pop %v251
          %v253 = vlaneseq
          %v254 = vand.u32 %v253, 127
          %s255 = smul.u32 %s152, 128
          %v256 = vstv %s255
          %v257 = vadd.s32 %v256, %v254
          %vm258 = vcmp.lt.s32.totalorder %v257, 192
          %v259 = vsel %vm258, %v238, 0.0
          %v260 = vsel %vm258, %v240, 0.0
          %v261 = vsel %vm258, %v242, 0.0
          %v262 = vsel %vm258, %v244, 0.0
          %v263 = vsel %vm258, %v246, 0.0
          %v264 = vsel %vm258, %v248, 0.0
          %v265 = vsel %vm258, %v250, 0.0
          %v266 = vsel %vm258, %v252, 0.0
          %v267 = vadd.f32 %v259, 0.0
          %v268 = vadd.f32 %v260, 0.0
          %v269 = vadd.f32 %v261, 0.0
          %v270 = vadd.f32 %v262, 0.0
          %v271 = vadd.f32 %v263, 0.0
          %v272 = vadd.f32 %v264, 0.0
          %v273 = vadd.f32 %v265, 0.0
          %v274 = vadd.f32 %v266, 0.0
          %v275 = vld [vmem:[%s150] sm:$0xff]
          %v276 = vld [vmem:[%s150 + $0x8] sm:$0xff]
          %v277 = vld [vmem:[%s150 + $0x10] sm:$0xff]
          %v278 = vld [vmem:[%s150 + $0x18] sm:$0xff]
          %v279 = vld [vmem:[%s150 + $0x20] sm:$0xff]
          %v280 = vld [vmem:[%s150 + $0x28] sm:$0xff]
          %v281 = vld [vmem:[%s150 + $0x30] sm:$0xff]
          %v282 = vld [vmem:[%s150 + $0x38] sm:$0xff]
          %v283 = vadd.f32 %v275, %v267
          %v284 = vadd.f32 %v276, %v268
          %v285 = vadd.f32 %v277, %v269
          %v286 = vadd.f32 %v278, %v270
          %v287 = vadd.f32 %v279, %v271
          %v288 = vadd.f32 %v280, %v272
          %v289 = vadd.f32 %v281, %v273
          %v290 = vadd.f32 %v282, %v274
          %291 = vst [vmem:[%s150] sm:$0xff] %v283
          %292 = vst [vmem:[%s150 + $0x8] sm:$0xff] %v284
          %293 = vst [vmem:[%s150 + $0x10] sm:$0xff] %v285
          %294 = vst [vmem:[%s150 + $0x18] sm:$0xff] %v286
          %295 = vst [vmem:[%s150 + $0x20] sm:$0xff] %v287
          %296 = vst [vmem:[%s150 + $0x28] sm:$0xff] %v288
          %297 = vst [vmem:[%s150 + $0x30] sm:$0xff] %v289
          %298 = vst [vmem:[%s150 + $0x38] sm:$0xff] %v290
        $region40: #{tpu_custom_call.1} parent=23 // pred_fallthru
          _
        %s299 = sand.u32 %s66, 1
        %s300 = scalar_lea.sflag [#allocation4], %s299
        %s301 = sand.u32 %s66, 1
        %s302 = smul.addr %s301, 64
        %s303 = scalar_lea.vmem [#allocation5], %s302
        // Predicated region
        $region41: #{tpu_custom_call.1} parent=23 // pred_check
          %p304 = pneg %p76
        $region42: #{tpu_custom_call.1} parent=23 // pred_check_branch
          %306 = sbr.rel (%p304) target = $region44
        $region43: #{tpu_custom_call.1} parent=23 // pred_region
          %308 = vsyncadd %s300, 0
          %s309 = smul.addr %s22, 8
          %s310 = smul.addr %s309, 8
          %s311 = scalar_lea.hbm %s1, %s310
          %s312 = sshll.u32 %s303, 4
          %s313 = int_to_ptr.vmem [resolvable:$true] %s312
          %s314 = sshll.u32 %s311, 4
          %s315 = int_to_ptr.hbm [resolvable:$true] %s314
          %320 = dma.vmem_to_hbm [thread:$0]  %s313, 1024, %s315, %s300, 128, 128, 8
        $region44: #{tpu_custom_call.1} parent=23 // pred_fallthru
          _
      $region24: #{tpu_custom_call.1} parent=5 // pred_fallthru
        _
      %p321 = scmp.le.s32.totalorder 2, %s13
      // Predicated region
      $region45: #{tpu_custom_call.1} parent=5 // pred_check
        %p322 = pneg %p321
      $region46: #{tpu_custom_call.1} parent=5 // pred_check_branch
        %324 = sbr.rel (%p322) target = $region48
      $region47: #{tpu_custom_call.1} parent=5 // pred_region
        %s325 = ssub.s32 %s13, 2
        // Predicated region
        $region49: #{tpu_custom_call.1} parent=47 // pred_check
          %p326 = pneg %p82
        $region50: #{tpu_custom_call.1} parent=47 // pred_check_branch
          %328 = sbr.rel (%p326) target = $region52
        $region51: #{tpu_custom_call.1} parent=47 // pred_region
          %s329 = sand.u32 %s67, 1
          %s330 = scalar_lea.sflag [#allocation4], %s329
          %s331 = sand.u32 %s67, 1
          %s332 = smul.addr %s331, 64
          %s333 = scalar_lea.vmem [#allocation5], %s332
          %335 = dma.done %s330, 1024
        $region52: #{tpu_custom_call.1} parent=47 // pred_fallthru
          _
      $region48: #{tpu_custom_call.1} parent=5 // pred_fallthru
        _
    $region6: #{tpu_custom_call.1} parent=1 // loop_footer
      %s17 = sadd.s32 1, %s13
    $region7: #{tpu_custom_call.1} parent=1 // loop_footer_branch
      %12 = sbr.rel target = $region3
    $region8: #{tpu_custom_call.1} parent=1 // loop_exit
      _
    %336 = vsyncpa [#allocation3], 1
    %s337 = scalar_lea.sflag [#allocation3], 1
    %338 = vsyncpa %s337, 1
    %339 = vsyncpa [#allocation4], 1
    %s340 = scalar_lea.sflag [#allocation4], 1
    %341 = vsyncpa %s340, 1

</llo_original>
